<compile_context>
chip_gen: v7x
topology: tpu7x:2x2x1
jax: 0.10.0
libtpu: 0.0.40
codegen_flags: <defaults>
</compile_context>

<pallas_src>
import functools

import jax
import jax.numpy as jnp
from jax.experimental import pallas as pl
from jax.experimental.pallas import tpu as pltpu


def mask_conv2d_kernel(x_ref, w_ref, m_ref, b_ref, o_ref, patches,
                       *, b_tile, cin, kh, kw, wp, lo):
    """One batch-tile per grid step.

    x_ref:   (B_TILE, Cin, Lin)        padded-flat input            (VMEM)
    w_ref:   (Cout, KH*KW*Cin)         weight, tap-major/chan-minor (VMEM)
    m_ref:   (1,    KH*KW*Cin)         mask scalar per tap x Cin    (VMEM)
    b_ref:   (Cout, 1)                 bias                         (VMEM)
    o_ref:   (B_TILE, Cout, Lo)        output in padded-flat coords (VMEM)
    patches: (KH*KW*Cin, B_TILE*Lo)    im2col scratch               (VMEM scratch)
    """
    n_taps = kh * kw

    # im2col: every tap is a contiguous lane slice of the padded-flat input.
    for b in range(b_tile):
        for t in range(n_taps):
            off = (t // kw) * wp + (t % kw)
            patches[t * cin:(t + 1) * cin, b * lo:(b + 1) * lo] = \
                x_ref[b, :, off:off + lo]

    # mask applied once per grid step to the (Cout, K) weight tile.
    wm = w_ref[...] * m_ref[...]

    # single fused MXU matmul: (Cout, K=KH*KW*Cin) @ (K, B_TILE*Lo), f32 accumulate.
    acc = jnp.dot(wm, patches[...], preferred_element_type=jnp.float32)
    acc = acc + b_ref[...]  # (Cout, 1) broadcast

    for b in range(b_tile):
        o_ref[b] = acc[:, b * lo:(b + 1) * lo].astype(o_ref.dtype)


def mask_conv2d(x_nchw, weight, bias, mask, *, stride=1, padding=1,
                dilation=1, groups=1, b_tile=None):
    """x_nchw: (N, Cin, H, W); weight: (Cout, Cin, KH, KW); bias: (Cout,);
    mask: (KH, KW) (or (1,1,KH,KW)).  Returns NCHW output."""
    # Only the module config actually used is supported.
    assert stride == 1 and dilation == 1 and groups == 1, \
        "mask_conv2d kernel supports stride=1, dilation=1, groups=1 only"

    N, Cin, H, W = x_nchw.shape
    Cout, Cin_w, KH, KW = weight.shape
    assert Cin_w == Cin

    Hp, Wp = H + 2 * padding, W + 2 * padding
    Ho, Wo = Hp - KH + 1, Wp - KW + 1
    Lo = Ho * Wp                              # output length in padded-flat coords
    Lin = (KH - 1) * Wp + (KW - 1) + Lo       # = Hp*Wp + (KW-1): max tap offset + Lo
    K = KH * KW * Cin

    # Batch tile: keep >= 2 parallel grid steps when possible (v7x has 2 TCs),
    # otherwise fold batch to amortize per-step overhead.
    if b_tile is None:
        b_tile = N // 2 if (N % 2 == 0 and N >= 4) else 1
    assert N % b_tile == 0
    grid = (N // b_tile,)

    # ---- cheap layout glue in plain JAX (no activation transposes) ----
    x_pad = jnp.pad(x_nchw, ((0, 0), (0, 0), (padding, padding), (padding, padding)))
    x_flat = x_pad.reshape(N, Cin, Hp * Wp)                       # contiguous, free
    x_flat = jnp.pad(x_flat, ((0, 0), (0, 0), (0, Lin - Hp * Wp)))  # +(KW-1) zeros
    # weight -> (Cout, KH*KW*Cin): tap-major, channel-minor (matches patches rows).
    w2 = jnp.transpose(weight, (0, 2, 3, 1)).reshape(Cout, K)
    # mask -> (1, KH*KW*Cin): one scalar per tap, repeated over Cin.
    m2 = jnp.repeat(jnp.asarray(mask, jnp.float32).reshape(-1), Cin).reshape(1, K)
    b2 = bias.reshape(Cout, 1)

    kernel = functools.partial(mask_conv2d_kernel, b_tile=b_tile, cin=Cin,
                               kh=KH, kw=KW, wp=Wp, lo=Lo)

    out_flat = pl.pallas_call(
        kernel,
        out_shape=jax.ShapeDtypeStruct((N, Cout, Lo), x_nchw.dtype),
        grid_spec=pltpu.PrefetchScalarGridSpec(
            num_scalar_prefetch=0,
            grid=grid,
            in_specs=[
                pl.BlockSpec((b_tile, Cin, Lin), lambda n: (n, 0, 0)),
                pl.BlockSpec((Cout, K), lambda n: (0, 0)),
                pl.BlockSpec((1, K), lambda n: (0, 0)),
                pl.BlockSpec((Cout, 1), lambda n: (0, 0)),
            ],
            out_specs=pl.BlockSpec((b_tile, Cout, Lo), lambda n: (n, 0, 0)),
            scratch_shapes=[pltpu.VMEM((K, b_tile * Lo), jnp.float32)],
        ),
        compiler_params=pltpu.CompilerParams(
            dimension_semantics=("parallel",)),
    )(x_flat, w2, m2, b2)

    # Drop the (Wp - Wo) junk columns of each padded-flat output row.
    out = out_flat.reshape(N, Cout, Ho, Wp)[..., :Wo]
    return out


if __name__ == "__main__":
    key = jax.random.PRNGKey(0)
    k_x, k_w, k_b, k_m = jax.random.split(key, 4)

    # Conv2d(4, 8, kernel_size=3, stride=1, padding=1)
    N, Cin, H, W = 2, 4, 16, 16
    Cout, KH, KW = 8, 3, 3
    pad = 1

    x = jax.random.normal(k_x, (N, Cin, H, W), jnp.float32)
    weight = jax.random.normal(k_w, (Cout, Cin, KH, KW), jnp.float32) * 0.1
    bias = jax.random.normal(k_b, (Cout,), jnp.float32) * 0.1
    # Module __init__ sets mask = ones((KH, KW)); use non-trivial deterministic
    # values here so the mask-multiply path is actually exercised.
    mask = jax.random.uniform(k_m, (KH, KW), jnp.float32, 0.5, 1.5)

    out = mask_conv2d(x, weight, bias, mask, padding=pad)
    out = jax.block_until_ready(out)

    # Reference: conv2d with masked weights (same semantics as the PyTorch module).
    masked_w = weight * mask.reshape(1, 1, KH, KW)
    ref = jax.lax.conv_general_dilated(
        x, masked_w, window_strides=(1, 1), padding=((pad, pad), (pad, pad)),
        dimension_numbers=("NCHW", "OIHW", "NCHW"),
    ) + bias.reshape(1, Cout, 1, 1)

    assert out.shape == (N, Cout, H, W), out.shape
    err = float(jnp.max(jnp.abs(out - ref)))
    assert jnp.allclose(out, ref, atol=1e-3, rtol=1e-3), err
    print("KERNEL_OK")
</pallas_src>

<mosaic_0001>
module attributes {stable_mosaic.version = 11 : i64} {
  func.func @mask_conv2d_kernel(%arg0: i32, %arg1: memref<1x4x326xf32, #tpu.memory_space<vmem>>, %arg2: memref<8x36xf32, #tpu.memory_space<vmem>>, %arg3: memref<1x36xf32, #tpu.memory_space<vmem>>, %arg4: memref<8x1xf32, #tpu.memory_space<vmem>>, %arg5: memref<1x8x288xf32, #tpu.memory_space<vmem>>, %arg6: memref<36x288xf32, #tpu.memory_space<vmem>>) attributes {dimension_semantics = [#tpu.dimension_semantics<parallel>], iteration_bounds = array<i64: 2>, scalar_prefetch = 0 : i64, scratch_operands = 1 : i64, tpu.core_type = #tpu.core_type<tc>, window_params = [{transform_indices = @transform_0, window_bounds = array<i64: 1, 4, 326>}, {pipeline_mode = #tpu.pipeline_mode<synchronous>, transform_indices = @transform_1, window_bounds = array<i64: 8, 36>}, {pipeline_mode = #tpu.pipeline_mode<synchronous>, transform_indices = @transform_2, window_bounds = array<i64: 1, 36>}, {pipeline_mode = #tpu.pipeline_mode<synchronous>, transform_indices = @transform_3, window_bounds = array<i64: 8, 1>}, {transform_indices = @transform_4, window_bounds = array<i64: 1, 8, 288>}]} {
    %c0 = arith.constant 0 : index
    %c0_0 = arith.constant 0 : index
    %c0_1 = arith.constant 0 : index
    %0 = vector.load %arg1[%c0, %c0_0, %c0_1] : memref<1x4x326xf32, #tpu.memory_space<vmem>>, vector<1x4x288xf32>
    %1 = vector.shape_cast %0 : vector<1x4x288xf32> to vector<4x288xf32>
    %c0_2 = arith.constant 0 : index
    %c0_3 = arith.constant 0 : index
    %2 = vector.load %arg6[%c0_2, %c0_3] : memref<36x288xf32, #tpu.memory_space<vmem>>, vector<4x288xf32>
    tpu.vector_store %arg6[%c0_2, %c0_3], %1 {strides = array<i32>} : memref<36x288xf32, #tpu.memory_space<vmem>>, vector<4x288xf32>,
    %c0_4 = arith.constant 0 : index
    %c0_5 = arith.constant 0 : index
    %c1 = arith.constant 1 : index
    %3 = vector.load %arg1[%c0_4, %c0_5, %c1] : memref<1x4x326xf32, #tpu.memory_space<vmem>>, vector<1x4x288xf32>
    %4 = vector.shape_cast %3 : vector<1x4x288xf32> to vector<4x288xf32>
    %c4 = arith.constant 4 : index
    %c0_6 = arith.constant 0 : index
    %5 = vector.load %arg6[%c4, %c0_6] : memref<36x288xf32, #tpu.memory_space<vmem>>, vector<4x288xf32>
    tpu.vector_store %arg6[%c4, %c0_6], %4 {strides = array<i32>} : memref<36x288xf32, #tpu.memory_space<vmem>>, vector<4x288xf32>,
    %c0_7 = arith.constant 0 : index
    %c0_8 = arith.constant 0 : index
    %c2 = arith.constant 2 : index
    %6 = vector.load %arg1[%c0_7, %c0_8, %c2] : memref<1x4x326xf32, #tpu.memory_space<vmem>>, vector<1x4x288xf32>
    %7 = vector.shape_cast %6 : vector<1x4x288xf32> to vector<4x288xf32>
    %c8 = arith.constant 8 : index
    %c0_9 = arith.constant 0 : index
    %8 = vector.load %arg6[%c8, %c0_9] : memref<36x288xf32, #tpu.memory_space<vmem>>, vector<4x288xf32>
    tpu.vector_store %arg6[%c8, %c0_9], %7 {strides = array<i32>} : memref<36x288xf32, #tpu.memory_space<vmem>>, vector<4x288xf32>,
    %c0_10 = arith.constant 0 : index
    %c0_11 = arith.constant 0 : index
    %c18 = arith.constant 18 : index
    %9 = vector.load %arg1[%c0_10, %c0_11, %c18] : memref<1x4x326xf32, #tpu.memory_space<vmem>>, vector<1x4x288xf32>
    %10 = vector.shape_cast %9 : vector<1x4x288xf32> to vector<4x288xf32>
    %c12 = arith.constant 12 : index
    %c0_12 = arith.constant 0 : index
    %11 = vector.load %arg6[%c12, %c0_12] : memref<36x288xf32, #tpu.memory_space<vmem>>, vector<4x288xf32>
    tpu.vector_store %arg6[%c12, %c0_12], %10 {strides = array<i32>} : memref<36x288xf32, #tpu.memory_space<vmem>>, vector<4x288xf32>,
    %c0_13 = arith.constant 0 : index
    %c0_14 = arith.constant 0 : index
    %c19 = arith.constant 19 : index
    %12 = vector.load %arg1[%c0_13, %c0_14, %c19] : memref<1x4x326xf32, #tpu.memory_space<vmem>>, vector<1x4x288xf32>
    %13 = vector.shape_cast %12 : vector<1x4x288xf32> to vector<4x288xf32>
    %c16 = arith.constant 16 : index
    %c0_15 = arith.constant 0 : index
    %14 = vector.load %arg6[%c16, %c0_15] : memref<36x288xf32, #tpu.memory_space<vmem>>, vector<4x288xf32>
    tpu.vector_store %arg6[%c16, %c0_15], %13 {strides = array<i32>} : memref<36x288xf32, #tpu.memory_space<vmem>>, vector<4x288xf32>,
    %c0_16 = arith.constant 0 : index
    %c0_17 = arith.constant 0 : index
    %c20 = arith.constant 20 : index
    %15 = vector.load %arg1[%c0_16, %c0_17, %c20] : memref<1x4x326xf32, #tpu.memory_space<vmem>>, vector<1x4x288xf32>
    %16 = vector.shape_cast %15 : vector<1x4x288xf32> to vector<4x288xf32>
    %c20_18 = arith.constant 20 : index
    %c0_19 = arith.constant 0 : index
    %17 = vector.load %arg6[%c20_18, %c0_19] : memref<36x288xf32, #tpu.memory_space<vmem>>, vector<4x288xf32>
    tpu.vector_store %arg6[%c20_18, %c0_19], %16 {strides = array<i32>} : memref<36x288xf32, #tpu.memory_space<vmem>>, vector<4x288xf32>,
    %c0_20 = arith.constant 0 : index
    %c0_21 = arith.constant 0 : index
    %c36 = arith.constant 36 : index
    %18 = vector.load %arg1[%c0_20, %c0_21, %c36] : memref<1x4x326xf32, #tpu.memory_space<vmem>>, vector<1x4x288xf32>
    %19 = vector.shape_cast %18 : vector<1x4x288xf32> to vector<4x288xf32>
    %c24 = arith.constant 24 : index
    %c0_22 = arith.constant 0 : index
    %20 = vector.load %arg6[%c24, %c0_22] : memref<36x288xf32, #tpu.memory_space<vmem>>, vector<4x288xf32>
    tpu.vector_store %arg6[%c24, %c0_22], %19 {strides = array<i32>} : memref<36x288xf32, #tpu.memory_space<vmem>>, vector<4x288xf32>,
    %c0_23 = arith.constant 0 : index
    %c0_24 = arith.constant 0 : index
    %c37 = arith.constant 37 : index
    %21 = vector.load %arg1[%c0_23, %c0_24, %c37] : memref<1x4x326xf32, #tpu.memory_space<vmem>>, vector<1x4x288xf32>
    %22 = vector.shape_cast %21 : vector<1x4x288xf32> to vector<4x288xf32>
    %c28 = arith.constant 28 : index
    %c0_25 = arith.constant 0 : index
    %23 = vector.load %arg6[%c28, %c0_25] : memref<36x288xf32, #tpu.memory_space<vmem>>, vector<4x288xf32>
    tpu.vector_store %arg6[%c28, %c0_25], %22 {strides = array<i32>} : memref<36x288xf32, #tpu.memory_space<vmem>>, vector<4x288xf32>,
    %c0_26 = arith.constant 0 : index
    %c0_27 = arith.constant 0 : index
    %c38 = arith.constant 38 : index
    %24 = vector.load %arg1[%c0_26, %c0_27, %c38] : memref<1x4x326xf32, #tpu.memory_space<vmem>>, vector<1x4x288xf32>
    %25 = vector.shape_cast %24 : vector<1x4x288xf32> to vector<4x288xf32>
    %c32 = arith.constant 32 : index
    %c0_28 = arith.constant 0 : index
    %26 = vector.load %arg6[%c32, %c0_28] : memref<36x288xf32, #tpu.memory_space<vmem>>, vector<4x288xf32>
    tpu.vector_store %arg6[%c32, %c0_28], %25 {strides = array<i32>} : memref<36x288xf32, #tpu.memory_space<vmem>>, vector<4x288xf32>,
    %c0_29 = arith.constant 0 : index
    %c0_30 = arith.constant 0 : index
    %27 = vector.load %arg2[%c0_29, %c0_30] : memref<8x36xf32, #tpu.memory_space<vmem>>, vector<8x36xf32>
    %c0_31 = arith.constant 0 : index
    %c0_32 = arith.constant 0 : index
    %28 = vector.load %arg3[%c0_31, %c0_32] : memref<1x36xf32, #tpu.memory_space<vmem>>, vector<1x36xf32>
    %29 = vector.broadcast %28 : vector<1x36xf32> to vector<8x36xf32>
    %30 = arith.mulf %27, %29 : vector<8x36xf32>
    %c0_33 = arith.constant 0 : index
    %c0_34 = arith.constant 0 : index
    %31 = vector.load %arg6[%c0_33, %c0_34] : memref<36x288xf32, #tpu.memory_space<vmem>>, vector<36x288xf32>
    %cst = arith.constant dense<0.000000e+00> : vector<8x288xf32>
    %32 = tpu.matmul %30, %31, %cst {dimension_numbers = #tpu.dot_dimension_numbers<[1], [0], [0], [1], [0, 0, 1, 1], [], []>} : vector<8x36xf32>, vector<36x288xf32>, vector<8x288xf32> -> vector<8x288xf32>
    %c0_35 = arith.constant 0 : index
    %c0_36 = arith.constant 0 : index
    %33 = vector.load %arg4[%c0_35, %c0_36] : memref<8x1xf32, #tpu.memory_space<vmem>>, vector<8x1xf32>
    %34 = vector.broadcast %33 : vector<8x1xf32> to vector<8x288xf32>
    %35 = arith.addf %32, %34 : vector<8x288xf32>
    %c0_37 = arith.constant 0 : index
    %c0_38 = arith.constant 0 : index
    %c0_39 = arith.constant 0 : index
    %36 = vector.load %arg5[%c0_37, %c0_38, %c0_39] : memref<1x8x288xf32, #tpu.memory_space<vmem>>, vector<1x8x288xf32>
    %37 = vector.shape_cast %36 : vector<1x8x288xf32> to vector<8x288xf32>
    %38 = vector.shape_cast %35 : vector<8x288xf32> to vector<1x8x288xf32>
    tpu.vector_store %arg5[%c0_37, %c0_38, %c0_39], %38 {strides = array<i32>} : memref<1x8x288xf32, #tpu.memory_space<vmem>>, vector<1x8x288xf32>,
    return
  }
  func.func @transform_0(%arg0: i32) -> (i32, i32, i32) {
    %c0_i32 = arith.constant 0 : i32
    %c0_i32_0 = arith.constant 0 : i32
    %c0_i32_1 = arith.constant 0 : i32
    return %arg0, %c0_i32, %c0_i32_0 : i32, i32, i32
  }
  func.func @transform_1(%arg0: i32) -> (i32, i32) {
    %c0_i32 = arith.constant 0 : i32
    %c0_i32_0 = arith.constant 0 : i32
    %c0_i32_1 = arith.constant 0 : i32
    return %c0_i32, %c0_i32_0 : i32, i32
  }
  func.func @transform_2(%arg0: i32) -> (i32, i32) {
    %c0_i32 = arith.constant 0 : i32
    %c0_i32_0 = arith.constant 0 : i32
    %c0_i32_1 = arith.constant 0 : i32
    return %c0_i32, %c0_i32_0 : i32, i32
  }
  func.func @transform_3(%arg0: i32) -> (i32, i32) {
    %c0_i32 = arith.constant 0 : i32
    %c0_i32_0 = arith.constant 0 : i32
    %c0_i32_1 = arith.constant 0 : i32
    return %c0_i32, %c0_i32_0 : i32, i32
  }
  func.func @transform_4(%arg0: i32) -> (i32, i32, i32) {
    %c0_i32 = arith.constant 0 : i32
    %c0_i32_0 = arith.constant 0 : i32
    %c0_i32_1 = arith.constant 0 : i32
    return %arg0, %c0_i32, %c0_i32_0 : i32, i32, i32
  }
}

</mosaic_0001>

<llo_original>
// kernel: tpu_custom_call.1
$region0: #{tpu_custom_call.1}
  #allocation0 [shape = 'u32[]', space=smem, size = 0x4, offset = 0x4, fixed_abs, tag = 'smem constant byte address 0x4 - core index']
  #allocation1 [shape = 'u32[144,128]{1,0:T(1,128)}', space=vmem, size = 0x12000, scoped, tag = 'internal scratch']
  #allocation2 [shape = 'f32[36,288]{1,0:T(8,128)}', space=vmem, size = 0xf000, scoped, tag = 'scratch operand']
  %s0 = inlined_call_operand.hbm [shape: f32[2,4,326], index: 0, kind: input, shape index: {}]
  %s1 = inlined_call_operand.vmem [shape: f32[8,36], index: 1, kind: input, shape index: {}]
  %s2 = inlined_call_operand.vmem [shape: f32[1,36], index: 2, kind: input, shape index: {}]
  %s3 = inlined_call_operand.vmem [shape: f32[8,1], index: 3, kind: input, shape index: {}]
  %s4 = inlined_call_operand.hbm [shape: f32[2,8,288], index: 4, kind: output, shape index: {}]
  %s5 = sld [smem:[#allocation0]]
  $region53: #{tpu_custom_call.1} parent=0
    _
  %s7 = ssub.s32 1, %s5
  %s8 = scalar_select 0, %s7, %s5
  $region1: #{tpu_custom_call.1} parent=0
    #allocation3 [shape = 'u8[12288]{0}', space=vmem, size = 0x3000, scoped, tag = 'input window, operand 0']
    #allocation4 [shape = 's32[2]{0}', space=sflag, size = 0x8, scoped, tag = 'scoped memory for tpu_custom_call.1']
    #allocation5 [shape = 's32[2]{0}', space=sflag, size = 0x8, scoped, tag = 'scoped memory for tpu_custom_call.1']
    #allocation6 [shape = 'u8[24576]{0}', space=vmem, size = 0x6000, scoped, tag = 'output window, operand 0']
    %9 = vsyncpa [#allocation4], 0
    %s10 = scalar_lea.sflag [#allocation4], 1
    %11 = vsyncpa %s10, 0
    %12 = vsyncpa [#allocation5], 0
    %s13 = scalar_lea.sflag [#allocation5], 1
    %14 = vsyncpa %s13, 0
    loop: start=0, step=1, limit=4
    $region2: #{tpu_custom_call.1} parent=1 // loop_pre_header
      _
    $region3: #{tpu_custom_call.1} parent=1 // loop_header
      %s16 = sphi 0, %s20
      %p17 = scmp.ge.s32.totalorder %s16, 4
      %s26 = sphi 0, %s28
      %s29 = sphi 0, %s26
      %s30 = sphi 0, %s29
      %s46 = sphi 0, %s30
      %s50 = sphi 0, %s50
      %s52 = sphi 0, %s50
      %s53 = sphi 0, %s52
      %s67 = sphi 0, %s53
      %s71 = sphi 0, %s71
      %s73 = sphi 0, %s71
      %s74 = sphi 0, %s73
      %s88 = sphi 0, %s74
      %s92 = sphi 0, %s92
      %s94 = sphi 0, %s92
      %s95 = sphi 0, %s94
      %s109 = sphi 0, %s95
      %s115 = sphi 0, %s117
      %s118 = sphi 0, %s115
      %s119 = sphi 0, %s118
      %s135 = sphi 0, %s119
    $region4: #{tpu_custom_call.1} parent=1 // loop_header_branch
      %19 = sbr.rel (%p17) target = $region8
    $region5: #{tpu_custom_call.1} parent=1 // loop_body
      %s21 = ssub.s32 %s16, 1
      %s22 = ssub.s32 %s16, 2
      %s23 = sadd.s32 %s16, 1
      %s24 = ssub.s32 %s16, %s23
      %p25 = scmp.eq.s32.totalorder %s24, 0
      %s27 = sadd.s32 %s26, 1
      %s28 = scalar_select %p25, %s26, %s27
      %p31 = pneg %p25
      %p32 = scmp.eq.s32.totalorder %s16, 1
      %p33 = por %p31, %p32
      %p34 = scmp.ne.s32.totalorder %s26, %s29
      %p35 = scmp.eq.s32.totalorder %s16, 0
      %p36 = por %p34, %p35
      %p37 = scmp.ne.s32.totalorder %s26, %s29
      %p38 = scmp.eq.s32.totalorder %s21, 1
      %p39 = por %p37, %p38
      %p40 = scmp.ne.s32.totalorder %s29, %s30
      %p41 = scmp.eq.s32.totalorder %s21, 0
      %p42 = por %p40, %p41
      %p43 = scmp.ne.s32.totalorder %s29, %s30
      %p44 = scmp.eq.s32.totalorder %s22, 1
      %p45 = por %p43, %p44
      %p47 = scmp.ne.s32.totalorder %s30, %s46
      %p48 = scmp.eq.s32.totalorder %s22, 0
      %p49 = por %p47, %p48
      %s51 = sadd.s32 %s50, 1
      %p54 = scmp.eq.s32.totalorder %s16, 1
      %p55 = scmp.ne.s32.totalorder %s50, %s52
      %p56 = scmp.eq.s32.totalorder %s16, 0
      %p57 = por %p55, %p56
      %p58 = scmp.ne.s32.totalorder %s50, %s52
      %p59 = scmp.eq.s32.totalorder %s21, 1
      %p60 = por %p58, %p59
      %p61 = scmp.ne.s32.totalorder %s52, %s53
      %p62 = scmp.eq.s32.totalorder %s21, 0
      %p63 = por %p61, %p62
      %p64 = scmp.ne.s32.totalorder %s52, %s53
      %p65 = scmp.eq.s32.totalorder %s22, 1
      %p66 = por %p64, %p65
      %p68 = scmp.ne.s32.totalorder %s53, %s67
      %p69 = scmp.eq.s32.totalorder %s22, 0
      %p70 = por %p68, %p69
      %s72 = sadd.s32 %s71, 1
      %p75 = scmp.eq.s32.totalorder %s16, 1
      %p76 = scmp.ne.s32.totalorder %s71, %s73
      %p77 = scmp.eq.s32.totalorder %s16, 0
      %p78 = por %p76, %p77
      %p79 = scmp.ne.s32.totalorder %s71, %s73
      %p80 = scmp.eq.s32.totalorder %s21, 1
      %p81 = por %p79, %p80
      %p82 = scmp.ne.s32.totalorder %s73, %s74
      %p83 = scmp.eq.s32.totalorder %s21, 0
      %p84 = por %p82, %p83
      %p85 = scmp.ne.s32.totalorder %s73, %s74
      %p86 = scmp.eq.s32.totalorder %s22, 1
      %p87 = por %p85, %p86
      %p89 = scmp.ne.s32.totalorder %s74, %s88
      %p90 = scmp.eq.s32.totalorder %s22, 0
      %p91 = por %p89, %p90
      %s93 = sadd.s32 %s92, 1
      %p96 = scmp.eq.s32.totalorder %s16, 1
      %p97 = scmp.ne.s32.totalorder %s92, %s94
      %p98 = scmp.eq.s32.totalorder %s16, 0
      %p99 = por %p97, %p98
      %p100 = scmp.ne.s32.totalorder %s92, %s94
      %p101 = scmp.eq.s32.totalorder %s21, 1
      %p102 = por %p100, %p101
      %p103 = scmp.ne.s32.totalorder %s94, %s95
      %p104 = scmp.eq.s32.totalorder %s21, 0
      %p105 = por %p103, %p104
      %p106 = scmp.ne.s32.totalorder %s94, %s95
      %p107 = scmp.eq.s32.totalorder %s22, 1
      %p108 = por %p106, %p107
      %p110 = scmp.ne.s32.totalorder %s95, %s109
      %p111 = scmp.eq.s32.totalorder %s22, 0
      %p112 = por %p110, %p111
      %s113 = ssub.s32 %s16, %s23
      %p114 = scmp.eq.s32.totalorder %s113, 0
      %s116 = sadd.s32 %s115, 1
      %s117 = scalar_select %p114, %s115, %s116
      %p120 = pneg %p114
      %p121 = scmp.eq.s32.totalorder %s16, 1
      %p122 = por %p120, %p121
      %p123 = scmp.ne.s32.totalorder %s115, %s118
      %p124 = scmp.eq.s32.totalorder %s16, 0
      %p125 = por %p123, %p124
      %p126 = scmp.ne.s32.totalorder %s115, %s118
      %p127 = scmp.eq.s32.totalorder %s21, 1
      %p128 = por %p126, %p127
      %p129 = scmp.ne.s32.totalorder %s118, %s119
      %p130 = scmp.eq.s32.totalorder %s21, 0
      %p131 = por %p129, %p130
      %p132 = scmp.ne.s32.totalorder %s118, %s119
      %p133 = scmp.eq.s32.totalorder %s22, 1
      %p134 = por %p132, %p133
      %p136 = scmp.ne.s32.totalorder %s119, %s135
      %p137 = scmp.eq.s32.totalorder %s22, 0
      %p138 = por %p136, %p137
      %p139 = scmp.le.s32.totalorder 1, %s16
      %p140 = scmp.lt.s32.totalorder %s16, 3
      %p141 = pnand %p139, %p140
      %p142 = pneg %p141
      // Predicated region
      $region9: #{tpu_custom_call.1} parent=5 // pred_check
        _
      $region10: #{tpu_custom_call.1} parent=5 // pred_check_branch
        %144 = sbr.rel (%p141) target = $region12
      $region11: #{tpu_custom_call.1} parent=5 // pred_region
        %s145 = ssub.s32 %s16, 1
        // Predicated region
        $region13: #{tpu_custom_call.1} parent=11 // pred_check
          %p146 = pneg %p63
        $region14: #{tpu_custom_call.1} parent=11 // pred_check_branch
          %148 = sbr.rel (%p146) target = $region16
        $region15: #{tpu_custom_call.1} parent=11 // pred_region
          _
        $region16: #{tpu_custom_call.1} parent=11 // pred_fallthru
          _
        // Predicated region
        $region17: #{tpu_custom_call.1} parent=11 // pred_check
          %p149 = pneg %p84
        $region18: #{tpu_custom_call.1} parent=11 // pred_check_branch
          %151 = sbr.rel (%p149) target = $region20
        $region19: #{tpu_custom_call.1} parent=11 // pred_region
          _
        $region20: #{tpu_custom_call.1} parent=11 // pred_fallthru
          _
        // Predicated region
        $region21: #{tpu_custom_call.1} parent=11 // pred_check
          %p152 = pneg %p105
        $region22: #{tpu_custom_call.1} parent=11 // pred_check_branch
          %154 = sbr.rel (%p152) target = $region24
        $region23: #{tpu_custom_call.1} parent=11 // pred_region
          _
        $region24: #{tpu_custom_call.1} parent=11 // pred_fallthru
          _
      $region12: #{tpu_custom_call.1} parent=5 // pred_fallthru
        _
      %p155 = scmp.lt.s32.totalorder %s16, 2
      // Predicated region
      $region25: #{tpu_custom_call.1} parent=5 // pred_check
        %p156 = pneg %p155
      $region26: #{tpu_custom_call.1} parent=5 // pred_check_branch
        %158 = sbr.rel (%p156) target = $region28
      $region27: #{tpu_custom_call.1} parent=5 // pred_region
        // Predicated region
        $region29: #{tpu_custom_call.1} parent=27 // pred_check
          %p159 = pneg %p36
        $region30: #{tpu_custom_call.1} parent=27 // pred_check_branch
          %161 = sbr.rel (%p159) target = $region32
        $region31: #{tpu_custom_call.1} parent=27 // pred_region
          %s162 = sand.u32 %s26, 1
          %s163 = scalar_lea.sflag [#allocation4], %s162
          %s164 = sand.u32 %s26, 1
          %s165 = smul.addr %s164, 12
          %s166 = scalar_lea.vmem [#allocation3], %s165
          %s168 = ssub.s32 192, 192
          %169 = vsyncadd %s163, %s168
          %s170 = smul.addr %s16, 3
          %s171 = smul.addr %s170, 64
          %s172 = scalar_lea.hbm %s0, %s171
          %s174 = sshll.u32 %s166, 4
          %s175 = int_to_ptr.vmem [resolvable:$true] %s174
          %177 = dma.hbm_to_vmem [thread:$0]  %s172, 192, %s175, %s163
        $region32: #{tpu_custom_call.1} parent=27 // pred_fallthru
          _
      $region28: #{tpu_custom_call.1} parent=5 // pred_fallthru
        _
      %p178 = scmp.le.s32.totalorder 1, %s16
      %p179 = scmp.lt.s32.totalorder %s16, 3
      %p180 = pnand %p178, %p179
      %p181 = pneg %p180
      // Predicated region
      $region33: #{tpu_custom_call.1} parent=5 // pred_check
        _
      $region34: #{tpu_custom_call.1} parent=5 // pred_check_branch
        %183 = sbr.rel (%p180) target = $region36
      $region35: #{tpu_custom_call.1} parent=5 // pred_region
        %s184 = ssub.s32 %s16, 1
        %s185 = sand.u32 %s29, 1
        %s186 = scalar_lea.sflag [#allocation4], %s185
        %s187 = sand.u32 %s29, 1
        %s188 = smul.addr %s187, 12
        %s189 = scalar_lea.vmem [#allocation3], %s188
        // Predicated region
        $region37: #{tpu_custom_call.1} parent=35 // pred_check
          %p190 = pneg %p42
        $region38: #{tpu_custom_call.1} parent=35 // pred_check_branch
          %192 = sbr.rel (%p190) target = $region40
        $region39: #{tpu_custom_call.1} parent=35 // pred_region
          %193 = dma.done %s186, 192
        $region40: #{tpu_custom_call.1} parent=35 // pred_fallthru
          _
        %s194 = sand.u32 %s29, 1
        %s195 = scalar_lea.sflag [#allocation4], %s194
        %s196 = sand.u32 %s29, 1
        %s197 = smul.addr %s196, 12
        %s198 = scalar_lea.vmem [#allocation3], %s197
        %p199 = pneg %p42
        %p200 = pneg %p39
        %p201 = pneg %p63
        %p202 = pneg %p60
        %p203 = pneg %p84
        %p204 = pneg %p81
        %p205 = pneg %p105
        %p206 = pneg %p102
        %p207 = pneg %p131
        %p208 = pneg %p128
        %s209 = sand.u32 %s118, 1
        %s210 = scalar_lea.sflag [#allocation5], %s209
        %s211 = sand.u32 %s118, 1
        %s212 = smul.addr %s211, 24
        %s213 = scalar_lea.vmem [#allocation6], %s212
        %v214 = vld [vmem:[%s189] sm:$0xff]
        %v215 = vld [vmem:[%s189 + $0x8] sm:$0xf]
        %v217 = vcombine.high %v214, %v214
        %219 = vst [vmem:[#allocation2] sm:$0xf] %v214
        %220 = vst [vmem:[#allocation2 + $0x8] sm:$0xf] %v217
        %vm221 = vcmask 257024
        %222 = vst.msk [vmem:[#allocation2 + $0x10] sm:$0xf] %vm221, %v215
        %v223 = vld [vmem:[%s189] sm:$0xff]
        %v224 = vld [vmem:[%s189 + $0x8] sm:$0xf]
        %v227 = vcombine.low %v223, %v223
        %v228 = vcombine.low %v224, %v224
        %229 = vrot.lane.b32.xlu0 %v227, 127
        %v230 = vpop.permute.xlu0 %229
        %231 = vrot.lane.b32.xlu0 %v223, 127
        %v232 = vpop.permute.xlu0 %231
        %233 = vrot.lane.b32.xlu0 %v228, 127
        %v234 = vpop.permute.xlu0 %233
        %vm235 = vcmask 1039360
        %v236 = vsel %vm235, %v230, %v232
        %v237 = vsel %vm235, %v232, %v234
        %241 = vst [vmem:[#allocation2] sm:$0xf0] %v236
        %242 = vst [vmem:[#allocation2 + $0x8] sm:$0xf0] %v237
        %vm243 = vcmask 261124
        %244 = vst.msk [vmem:[#allocation2 + $0x10] sm:$0xf0] %vm243, %v234
        %v245 = vld [vmem:[%s189] sm:$0xff]
        %v246 = vld [vmem:[%s189 + $0x8] sm:$0xf]
        %v249 = vcombine.high %v245, %v245
        %250 = vrot.lane.b32.xlu0 %v245, 126
        %v251 = vpop.permute.xlu0 %250
        %252 = vrot.lane.b32.xlu0 %v249, 126
        %v253 = vpop.permute.xlu0 %252
        %254 = vrot.lane.b32.xlu0 %v246, 126
        %v255 = vpop.permute.xlu0 %254
        %vm256 = vcmask 1031168
        %v257 = vsel %vm256, %v251, %v253
        %v258 = vsel %vm256, %v253, %v255
        %262 = vst [vmem:[#allocation2 + $0x18] sm:$0xf] %v257
        %263 = vst [vmem:[#allocation2 + $0x20] sm:$0xf] %v258
        %264 = vst.msk [vmem:[#allocation2 + $0x28] sm:$0xf] %vm221, %v255
        %v265 = vld [vmem:[%s189] sm:$0xff]
        %v266 = vld [vmem:[%s189 + $0x8] sm:$0xf]
        %v269 = vcombine.low %v265, %v265
        %v270 = vcombine.low %v266, %v266
        %271 = vrot.lane.b32.xlu0 %v269, 110
        %v272 = vpop.permute.xlu0 %271
        %273 = vrot.lane.b32.xlu0 %v265, 110
        %v274 = vpop.permute.xlu0 %273
        %275 = vrot.lane.b32.xlu0 %v270, 110
        %v276 = vpop.permute.xlu0 %275
        %vm277 = vcmask 900096
        %v278 = vsel %vm277, %v272, %v274
        %v279 = vsel %vm277, %v274, %v276
        %283 = vst [vmem:[#allocation2 + $0x18] sm:$0xf0] %v278
        %284 = vst [vmem:[#allocation2 + $0x20] sm:$0xf0] %v279
        %285 = vst.msk [vmem:[#allocation2 + $0x28] sm:$0xf0] %vm243, %v276
        %v286 = vld [vmem:[%s189] sm:$0xff]
        %v287 = vld [vmem:[%s189 + $0x8] sm:$0xf]
        %v290 = vcombine.high %v286, %v286
        %291 = vrot.lane.b32.xlu0 %v286, 109
        %v292 = vpop.permute.xlu0 %291
        %293 = vrot.lane.b32.xlu0 %v290, 109
        %v294 = vpop.permute.xlu0 %293
        %295 = vrot.lane.b32.xlu0 %v287, 109
        %v296 = vpop.permute.xlu0 %295
        %vm297 = vcmask 891904
        %v298 = vsel %vm297, %v292, %v294
        %v299 = vsel %vm297, %v294, %v296
        %303 = vst [vmem:[#allocation2 + $0x30] sm:$0xf] %v298
        %304 = vst [vmem:[#allocation2 + $0x38] sm:$0xf] %v299
        %305 = vst.msk [vmem:[#allocation2 + $0x40] sm:$0xf] %vm221, %v296
        %v306 = vld [vmem:[%s189] sm:$0xff]
        %v307 = vld [vmem:[%s189 + $0x8] sm:$0xf]
        %v310 = vcombine.low %v306, %v306
        %v311 = vcombine.low %v307, %v307
        %312 = vrot.lane.b32.xlu0 %v310, 108
        %v313 = vpop.permute.xlu0 %312
        %314 = vrot.lane.b32.xlu0 %v306, 108
        %v315 = vpop.permute.xlu0 %314
        %316 = vrot.lane.b32.xlu0 %v311, 108
        %v317 = vpop.permute.xlu0 %316
        %vm318 = vcmask 883712
        %v319 = vsel %vm318, %v313, %v315
        %v320 = vsel %vm318, %v315, %v317
        %324 = vst [vmem:[#allocation2 + $0x30] sm:$0xf0] %v319
        %325 = vst [vmem:[#allocation2 + $0x38] sm:$0xf0] %v320
        %326 = vst.msk [vmem:[#allocation2 + $0x40] sm:$0xf0] %vm243, %v317
        %v327 = vld [vmem:[%s189] sm:$0xff]
        %v328 = vld [vmem:[%s189 + $0x8] sm:$0xf]
        %v331 = vcombine.high %v327, %v327
        %332 = vrot.lane.b32.xlu0 %v327, 92
        %v333 = vpop.permute.xlu0 %332
        %334 = vrot.lane.b32.xlu0 %v331, 92
        %v335 = vpop.permute.xlu0 %334
        %336 = vrot.lane.b32.xlu0 %v328, 92
        %v337 = vpop.permute.xlu0 %336
        %vm338 = vcmask 752640
        %v339 = vsel %vm338, %v333, %v335
        %v340 = vsel %vm338, %v335, %v337
        %344 = vst [vmem:[#allocation2 + $0x48] sm:$0xf] %v339
        %345 = vst [vmem:[#allocation2 + $0x50] sm:$0xf] %v340
        %346 = vst.msk [vmem:[#allocation2 + $0x58] sm:$0xf] %vm221, %v337
        %v347 = vld [vmem:[%s189] sm:$0xff]
        %v348 = vld [vmem:[%s189 + $0x8] sm:$0xf]
        %v351 = vcombine.low %v347, %v347
        %v352 = vcombine.low %v348, %v348
        %353 = vrot.lane.b32.xlu0 %v351, 91
        %v354 = vpop.permute.xlu0 %353
        %355 = vrot.lane.b32.xlu0 %v347, 91
        %v356 = vpop.permute.xlu0 %355
        %357 = vrot.lane.b32.xlu0 %v352, 91
        %v358 = vpop.permute.xlu0 %357
        %vm359 = vcmask 744448
        %v360 = vsel %vm359, %v354, %v356
        %v361 = vsel %vm359, %v356, %v358
        %365 = vst [vmem:[#allocation2 + $0x48] sm:$0xf0] %v360
        %366 = vst [vmem:[#allocation2 + $0x50] sm:$0xf0] %v361
        %367 = vst.msk [vmem:[#allocation2 + $0x58] sm:$0xf0] %vm243, %v358
        %v368 = vld [vmem:[%s189] sm:$0xff]
        %v369 = vld [vmem:[%s189 + $0x8] sm:$0xf]
        %v372 = vcombine.high %v368, %v368
        %373 = vrot.lane.b32.xlu0 %v368, 90
        %v374 = vpop.permute.xlu0 %373
        %375 = vrot.lane.b32.xlu0 %v372, 90
        %v376 = vpop.permute.xlu0 %375
        %377 = vrot.lane.b32.xlu0 %v369, 90
        %v378 = vpop.permute.xlu0 %377
        %vm379 = vcmask 736256
        %v380 = vsel %vm379, %v374, %v376
        %v381 = vsel %vm379, %v376, %v378
        %385 = vst [vmem:[#allocation2 + $0x60] sm:$0xf] %v380
        %386 = vst [vmem:[#allocation2 + $0x68] sm:$0xf] %v381
        %387 = vst.msk [vmem:[#allocation2 + $0x70] sm:$0xf] %vm221, %v378
        %v388 = vld [vmem:[%s1] sm:$0xff]
        %v389 = vld [vmem:[%s2] sm:$0x1]
        %v391 = vlaneseq
        %v392 = vshrl.u32 %v391, 7
        %v393 = vsub.s32 0, %v392
        %v394 = vrot.slane %v389, %v393
        %v396 = vmul.f32 %v388, %v394
        %v397 = vld [vmem:[#allocation2] sm:$0xff]
        %v398 = vld [vmem:[#allocation2 + $0x8] sm:$0xff]
        %v399 = vld [vmem:[#allocation2 + $0x10] sm:$0xff]
        %v400 = vld [vmem:[#allocation2 + $0x18] sm:$0xff]
        %v401 = vld [vmem:[#allocation2 + $0x20] sm:$0xff]
        %v402 = vld [vmem:[#allocation2 + $0x28] sm:$0xff]
        %v403 = vld [vmem:[#allocation2 + $0x30] sm:$0xff]
        %v404 = vld [vmem:[#allocation2 + $0x38] sm:$0xff]
        %v405 = vld [vmem:[#allocation2 + $0x40] sm:$0xff]
        %v406 = vld [vmem:[#allocation2 + $0x48] sm:$0xff]
        %v407 = vld [vmem:[#allocation2 + $0x50] sm:$0xff]
        %v408 = vld [vmem:[#allocation2 + $0x58] sm:$0xff]
        %v409 = vld [vmem:[#allocation2 + $0x60] sm:$0xf]
        %v410 = vld [vmem:[#allocation2 + $0x68] sm:$0xf]
        %v411 = vld [vmem:[#allocation2 + $0x70] sm:$0xf]
        %v412 = vld [vmem:[%s3] sm:$0xff]
        %414 = vset.pattern.permute.xlu0 0
        %415 = vperm.xlu0 %414, %v412
        %v416 = vpop.permute.xlu0 %415
        %vm418 = vcmask 293888
        %v420 = vsel %vm418, %v396, 0
        %vm422 = vcmask 1043456
        %v424 = vsel %vm422, %v409, 0
        %v427 = vsel %vm422, %v410, 0
        %v430 = vsel %vm422, %v411, 0
        %432 = vmatprep.subr.mxu0 %v398
        %433 = vmatpush1.msra.mxu0 %v397
        %434 = vmatprep.subr.mxu0 %v401
        %435 = vmatpush1.msra.mxu0 %v400
        %436 = vmatprep.subr.mxu0 %v404
        %437 = vmatpush1.msra.mxu0 %v403
        %438 = vmatprep.subr.mxu0 %v407
        %439 = vmatpush1.msra.mxu0 %v406
        %440 = vmatprep.subr.mxu0 %v427
        %441 = vmatpush1.msra.mxu0 %v424
        %442 = vmatprep.subr.mxu0 0.0
        %443 = vmatpush1.msra.mxu0 0.0
        %444 = vmatprep.subr.mxu0 0.0
        %445 = vmatpush1.msra.mxu0 0.0
        %446 = vmatprep.subr.mxu0 0.0
        %447 = vmatpush1.msra.mxu0 0.0
        %448 = vmatprep.subr.mxu0 0.0
        %449 = vmatpush1.msra.mxu0 0.0
        %450 = vmatprep.subr.mxu0 0.0
        %451 = vmatpush1.msra.mxu0 0.0
        %452 = vmatprep.subr.mxu0 0.0
        %453 = vmatpush1.msra.mxu0 0.0
        %454 = vmatprep.subr.mxu0 0.0
        %455 = vmatpush1.msra.mxu0 0.0
        %456 = vmatprep.subr.mxu0 0.0
        %457 = vmatpush1.msra.mxu0 0.0
        %458 = vmatprep.subr.mxu0 0.0
        %459 = vmatpush1.msra.mxu0 0.0
        %460 = vmatprep.subr.mxu0 0.0
        %461 = vmatpush1.msra.mxu0 0.0
        %462 = vmatprep.subr.mxu0 0.0
        %463 = vmatpush1.msra.mxu0 0.0
        %464 = vmatprep.subr.mxu0 0.0
        %465 = vmatpush1.msra.mxu0 0.0
        %466 = vmatprep.subr.mxu0 0.0
        %467 = vmatpush1.msra.mxu0 0.0
        %468 = vmatprep.subr.mxu0 0.0
        %469 = vmatpush1.msra.mxu0 0.0
        %470 = vmatprep.subr.mxu0 0.0
        %471 = vmatpush1.msra.mxu0 0.0
        %472 = vmatprep.subr.mxu0 0.0
        %473 = vmatpush1.msra.mxu0 0.0
        %474 = vmatprep.subr.mxu0 0.0
        %475 = vmatpush1.msra.mxu0 0.0
        %476 = vmatprep.subr.mxu0 0.0
        %477 = vmatpush1.msra.mxu0 0.0
        %478 = vmatprep.subr.mxu0 0.0
        %479 = vmatpush1.msra.mxu0 0.0
        %480 = vmatprep.subr.mxu0 0.0
        %481 = vmatpush1.msra.mxu0 0.0
        %482 = vmatprep.subr.mxu0 0.0
        %483 = vmatpush1.msra.mxu0 0.0
        %484 = vmatprep.subr.mxu0 0.0
        %485 = vmatpush1.msra.mxu0 0.0
        %486 = vmatprep.subr.mxu0 0.0
        %487 = vmatpush1.msra.mxu0 0.0
        %488 = vmatprep.subr.mxu0 0.0
        %489 = vmatpush1.msra.mxu0 0.0
        %490 = vmatprep.subr.mxu0 0.0
        %491 = vmatpush1.msra.mxu0 0.0
        %492 = vmatprep.subr.mxu0 0.0
        %493 = vmatpush1.msra.mxu0 0.0
        %494 = vmatprep.subr.mxu0 0.0
        %495 = vmatpush1.msra.mxu0 0.0
        %496 = vmatprep.mubr.f32.mxu0 0.0
        %497 = vmatmul.mubr.f32.gmra.mrb[0].mxu0 %v420
        %v498 = vpop.f32.mrb[0].mxu0
        %v499 = vadd.f32 %v416, %v498
        %v500 = vpop.f32.mrb[0].mxu0
        %v501 = vadd.f32 %v416, %v500
        %502 = vdwg.mxu0
        %503 = vmatprep.subr.mxu0 0.0
        %504 = vmatpush1.msra.mxu0 %v399
        %505 = vmatprep.subr.mxu0 0.0
        %506 = vmatpush1.msra.mxu0 %v402
        %507 = vmatprep.subr.mxu0 0.0
        %508 = vmatpush1.msra.mxu0 %v405
        %509 = vmatprep.subr.mxu0 0.0
        %510 = vmatpush1.msra.mxu0 %v408
        %511 = vmatprep.subr.mxu0 0.0
        %512 = vmatpush1.msra.mxu0 %v430
        %513 = vmatprep.subr.mxu0 0.0
        %514 = vmatpush1.msra.mxu0 0.0
        %515 = vmatprep.subr.mxu0 0.0
        %516 = vmatpush1.msra.mxu0 0.0
        %517 = vmatprep.subr.mxu0 0.0
        %518 = vmatpush1.msra.mxu0 0.0
        %519 = vmatprep.subr.mxu0 0.0
        %520 = vmatpush1.msra.mxu0 0.0
        %521 = vmatprep.subr.mxu0 0.0
        %522 = vmatpush1.msra.mxu0 0.0
        %523 = vmatprep.subr.mxu0 0.0
        %524 = vmatpush1.msra.mxu0 0.0
        %525 = vmatprep.subr.mxu0 0.0
        %526 = vmatpush1.msra.mxu0 0.0
        %527 = vmatprep.subr.mxu0 0.0
        %528 = vmatpush1.msra.mxu0 0.0
        %529 = vmatprep.subr.mxu0 0.0
        %530 = vmatpush1.msra.mxu0 0.0
        %531 = vmatprep.subr.mxu0 0.0
        %532 = vmatpush1.msra.mxu0 0.0
        %533 = vmatprep.subr.mxu0 0.0
        %534 = vmatpush1.msra.mxu0 0.0
        %535 = vmatprep.subr.mxu0 0.0
        %536 = vmatpush1.msra.mxu0 0.0
        %537 = vmatprep.subr.mxu0 0.0
        %538 = vmatpush1.msra.mxu0 0.0
        %539 = vmatprep.subr.mxu0 0.0
        %540 = vmatpush1.msra.mxu0 0.0
        %541 = vmatprep.subr.mxu0 0.0
        %542 = vmatpush1.msra.mxu0 0.0
        %543 = vmatprep.subr.mxu0 0.0
        %544 = vmatpush1.msra.mxu0 0.0
        %545 = vmatprep.subr.mxu0 0.0
        %546 = vmatpush1.msra.mxu0 0.0
        %547 = vmatprep.subr.mxu0 0.0
        %548 = vmatpush1.msra.mxu0 0.0
        %549 = vmatprep.subr.mxu0 0.0
        %550 = vmatpush1.msra.mxu0 0.0
        %551 = vmatprep.subr.mxu0 0.0
        %552 = vmatpush1.msra.mxu0 0.0
        %553 = vmatprep.subr.mxu0 0.0
        %554 = vmatpush1.msra.mxu0 0.0
        %555 = vmatprep.subr.mxu0 0.0
        %556 = vmatpush1.msra.mxu0 0.0
        %557 = vmatprep.subr.mxu0 0.0
        %558 = vmatpush1.msra.mxu0 0.0
        %559 = vmatprep.subr.mxu0 0.0
        %560 = vmatpush1.msra.mxu0 0.0
        %561 = vmatprep.subr.mxu0 0.0
        %562 = vmatpush1.msra.mxu0 0.0
        %563 = vmatprep.subr.mxu0 0.0
        %564 = vmatpush1.msra.mxu0 0.0
        %565 = vmatprep.subr.mxu0 0.0
        %566 = vmatpush1.msra.mxu0 0.0
        %567 = vmatprep.mubr.f32.mxu0 0.0
        %568 = vmatmul.mubr.f32.gmra.mrb[0].mxu0 %v420
        %v569 = vpop.f32.mrb[0].mxu0
        %v570 = vadd.f32 %v416, %v569
        %v571 = vpop.f32.mrb[0].mxu0
        %572 = vdwg.mxu0
        %573 = vst [vmem:[%s213] sm:$0xff] %v499
        %574 = vst [vmem:[%s213 + $0x8] sm:$0xff] %v501
        %vm575 = vcmask 261120
        %576 = vst.msk [vmem:[%s213 + $0x10] sm:$0xff] %vm575, %v570
        %s577 = sand.u32 %s118, 1
        %s578 = scalar_lea.sflag [#allocation5], %s577
        %s579 = sand.u32 %s118, 1
        %s580 = smul.addr %s579, 24
        %s581 = scalar_lea.vmem [#allocation6], %s580
        // Predicated region
        $region41: #{tpu_custom_call.1} parent=35 // pred_check
          %p582 = pneg %p128
        $region42: #{tpu_custom_call.1} parent=35 // pred_check_branch
          %584 = sbr.rel (%p582) target = $region44
        $region43: #{tpu_custom_call.1} parent=35 // pred_region
          %s586 = ssub.s32 384, 384
          %587 = vsyncadd %s578, %s586
          %s588 = smul.addr %s21, 3
          %s589 = smul.addr %s588, 128
          %s590 = scalar_lea.hbm %s4, %s589
          %s592 = sshll.u32 %s581, 4
          %s593 = int_to_ptr.vmem [resolvable:$true] %s592
          %595 = dma.vmem_to_hbm [thread:$0]  %s593, 384, %s590, %s578
        $region44: #{tpu_custom_call.1} parent=35 // pred_fallthru
          _
      $region36: #{tpu_custom_call.1} parent=5 // pred_fallthru
        _
      %p596 = scmp.le.s32.totalorder 2, %s16
      // Predicated region
      $region45: #{tpu_custom_call.1} parent=5 // pred_check
        %p597 = pneg %p596
      $region46: #{tpu_custom_call.1} parent=5 // pred_check_branch
        %599 = sbr.rel (%p597) target = $region48
      $region47: #{tpu_custom_call.1} parent=5 // pred_region
        %s600 = ssub.s32 %s16, 2
        // Predicated region
        $region49: #{tpu_custom_call.1} parent=47 // pred_check
          %p601 = pneg %p134
        $region50: #{tpu_custom_call.1} parent=47 // pred_check_branch
          %603 = sbr.rel (%p601) target = $region52
        $region51: #{tpu_custom_call.1} parent=47 // pred_region
          %s604 = sand.u32 %s119, 1
          %s605 = scalar_lea.sflag [#allocation5], %s604
          %s606 = sand.u32 %s119, 1
          %s607 = smul.addr %s606, 24
          %s608 = scalar_lea.vmem [#allocation6], %s607
          %609 = dma.done %s605, 384
        $region52: #{tpu_custom_call.1} parent=47 // pred_fallthru
          _
      $region48: #{tpu_custom_call.1} parent=5 // pred_fallthru
        _
    $region6: #{tpu_custom_call.1} parent=1 // loop_footer
      %s20 = sadd.s32 1, %s16
    $region7: #{tpu_custom_call.1} parent=1 // loop_footer_branch
      %15 = sbr.rel target = $region3
    $region8: #{tpu_custom_call.1} parent=1 // loop_exit
      _
    %610 = vsyncpa [#allocation4], 1
    %s611 = scalar_lea.sflag [#allocation4], 1
    %612 = vsyncpa %s611, 1
    %613 = vsyncpa [#allocation5], 1
    %s614 = scalar_lea.sflag [#allocation5], 1
    %615 = vsyncpa %s614, 1

</llo_original>
